<compile_context>
chip_gen: v7x
topology: tpu7x:2x2x1
jax: 0.10.0
libtpu: 0.0.40
codegen_flags: <defaults>
</compile_context>

<pallas_src>
import jax
import jax.numpy as jnp
from jax.experimental import pallas as pl
from jax.experimental.pallas import tpu as pltpu


def _round_up(x: int, m: int) -> int:
    return (x + m - 1) // m * m


def fc_multiply_kernel(x1_ref, x2_ref, wt_ref, b_ref, o_ref):
    # Elementwise multiply (VPU).
    prod = x1_ref[...] * x2_ref[...]
    # Match the weight's matmul dtype (bf16 MXU path if params were prepared
    # in bf16; no-op for f32).
    prod = prod.astype(wt_ref.dtype)
    # Dense layer (MXU): (TB, D_in) @ (D_in, TN) with f32 accumulation.
    acc = jnp.dot(prod, wt_ref[...], preferred_element_type=jnp.float32)
    # Bias add (broadcast over rows) + ReLU on the f32 accumulator.
    o_ref[...] = jnp.maximum(acc + b_ref[...], 0.0).astype(o_ref.dtype)


def prepare_fc_params(weight, bias, *, matmul_dtype=None):
    """One-time (parameter-load-time) prep for the kernel.

    weight: (D_out, D_in), bias: (D_out,)  -- nn.Linear layout.
    Returns (w_t, b2d, d_out): w_t is (D_in, D_out_p) (lane-dense, pre-
    transposed), b2d is (1, D_out_p) float32, d_out is the logical D_out.
    """
    d_out, d_in = weight.shape
    d_out_p = _round_up(d_out, 128)
    if d_out_p != d_out:
        weight = jnp.pad(weight, ((0, d_out_p - d_out), (0, 0)))
        bias = jnp.pad(bias, (0, d_out_p - d_out))
    w_t = weight.T  # (D_in, D_out_p): native MXU layout for prod @ w_t
    if matmul_dtype is not None:
        w_t = w_t.astype(matmul_dtype)
    return w_t, bias.reshape(1, d_out_p).astype(jnp.float32), d_out


def fc_multiply(input_1, input_2, w_t, b2d, d_out, *, tb: int = 512,
                tn: int = 512, max_resident_weight_bytes: int = (8 << 20)):
    """input_1, input_2: (B, D_in); w_t/b2d/d_out from prepare_fc_params."""
    B, D_in = input_1.shape
    D_in_w, D_out_p = w_t.shape
    assert D_in == D_in_w, (D_in, D_in_w)
    dtype = input_1.dtype
    in_itemsize = jnp.dtype(dtype).itemsize
    w_itemsize = jnp.dtype(w_t.dtype).itemsize

    # --- batch tile: biggest useful, but >= 2 parallel tiles when B allows
    # (v7x has 2 TensorCores; a single-tile grid leaves one idle).
    TB = min(tb, _round_up(B, 8))
    if pl.cdiv(B, TB) < 2 and B >= 16:
        TB = _round_up(pl.cdiv(B, 2), 8)
    nb = pl.cdiv(B, TB)

    w_bytes = D_in * D_out_p * w_itemsize
    resident = w_bytes <= max_resident_weight_bytes

    def build(single_buffer_params: bool):
        if resident:
            # Whole weight resident in VMEM; constant index_map.
            if single_buffer_params:
                w_spec = pl.BlockSpec((D_in, D_out_p), lambda i: (0, 0),
                                      pipeline_mode=pl.Buffered(1))
                b_spec = pl.BlockSpec((1, D_out_p), lambda i: (0, 0),
                                      pipeline_mode=pl.Buffered(1))
                w_vmem = w_bytes
            else:
                w_spec = pl.BlockSpec((D_in, D_out_p), lambda i: (0, 0))
                b_spec = pl.BlockSpec((1, D_out_p), lambda i: (0, 0))
                w_vmem = 2 * w_bytes
            grid = (nb,)
            in_specs = [
                pl.BlockSpec((TB, D_in), lambda i: (i, 0)),
                pl.BlockSpec((TB, D_in), lambda i: (i, 0)),
                w_spec,
                b_spec,
            ]
            out_specs = pl.BlockSpec((TB, D_out_p), lambda i: (i, 0))
            dims = ("parallel",)
            n_tile = D_out_p
        else:
            # Stream the weight: tile D_out on a second parallel axis
            # (keeps output tiles lane-dense, fits v7x's 64 MiB VMEM).
            TN = min(tn, D_out_p)  # tn is a multiple of 128
            grid = (nb, pl.cdiv(D_out_p, TN))
            in_specs = [
                pl.BlockSpec((TB, D_in), lambda i, j: (i, 0)),
                pl.BlockSpec((TB, D_in), lambda i, j: (i, 0)),
                pl.BlockSpec((D_in, TN), lambda i, j: (0, j)),
                pl.BlockSpec((1, TN), lambda i, j: (0, j)),
            ]
            out_specs = pl.BlockSpec((TB, TN), lambda i, j: (i, j))
            dims = ("parallel", "parallel")
            n_tile = TN
            w_vmem = 2 * D_in * TN * w_itemsize  # double-buffered stream

        # VMEM budget: 2 inputs double-buffered + output double-buffered
        # + weight + bias, with headroom; capped at 64 MiB (v7x physical).
        vmem_bytes = (2 * 2 * TB * D_in * in_itemsize
                      + 2 * TB * n_tile * in_itemsize
                      + w_vmem
                      + 2 * n_tile * 4)
        vmem_limit = max(16 << 20,
                         min(int(vmem_bytes * 1.5) + (4 << 20), 64 << 20))

        return pl.pallas_call(
            fc_multiply_kernel,
            out_shape=jax.ShapeDtypeStruct((B, D_out_p), dtype),
            grid_spec=pltpu.PrefetchScalarGridSpec(
                num_scalar_prefetch=0,
                grid=grid,
                in_specs=in_specs,
                out_specs=out_specs,
            ),
            compiler_params=pltpu.CompilerParams(
                dimension_semantics=dims,
                vmem_limit_bytes=vmem_limit,
            ),
        )

    if resident:
        try:
            out = build(True)(input_1, input_2, w_t, b2d)
        except Exception:
            # Fallback if this jax build rejects single-buffered pipeline_mode.
            out = build(False)(input_1, input_2, w_t, b2d)
    else:
        out = build(False)(input_1, input_2, w_t, b2d)

    return out if D_out_p == d_out else out[:, :d_out]


def _reference(input_1, input_2, weight, bias):
    return jnp.maximum((input_1 * input_2) @ weight.T + bias, 0.0)


def _init_linear(key, d_in, d_out):
    kw, kb = jax.random.split(key)
    bound = 1.0 / (d_in ** 0.5)
    w = jax.random.uniform(kw, (d_out, d_in), jnp.float32, -bound, bound)
    b = jax.random.uniform(kb, (d_out,), jnp.float32, -bound, bound)
    return w, b


if __name__ == "__main__":
    key = jax.random.PRNGKey(0)

    # --- 1) small shape matching the module spec ------------------------------
    B, D_in, D_out = 8, 32, 16
    key, k1, k2, kp = jax.random.split(key, 4)
    i1 = jax.random.normal(k1, (B, D_in), jnp.float32)
    i2 = jax.random.normal(k2, (B, D_in), jnp.float32)
    w, b = _init_linear(kp, D_in, D_out)
    w_t, b2d, dout = prepare_fc_params(w, b)

    out = jax.block_until_ready(fc_multiply(i1, i2, w_t, b2d, dout))
    ref = _reference(i1, i2, w, b)
    assert out.shape == (B, D_out)
    assert jnp.allclose(out, ref, atol=1e-5, rtol=1e-5)

    # --- 2) ragged batch (no input padding) + D_out lane padding, resident W --
    B2, D_in2, D_out2 = 520, 256, 192
    key, k1, k2, kp = jax.random.split(key, 4)
    i1b = jax.random.normal(k1, (B2, D_in2), jnp.float32)
    i2b = jax.random.normal(k2, (B2, D_in2), jnp.float32)
    w2, b2 = _init_linear(kp, D_in2, D_out2)
    w_t2, b2d2, dout2 = prepare_fc_params(w2, b2)

    out2 = jax.block_until_ready(fc_multiply(i1b, i2b, w_t2, b2d2, dout2))
    ref2 = _reference(i1b, i2b, w2, b2)
    assert out2.shape == (B2, D_out2)
    assert jnp.allclose(out2, ref2, atol=1e-4, rtol=1e-4)

    # --- 3) force the D_out-tiled (streaming-weight) path ---------------------
    B3, D_in3, D_out3 = 256, 128, 384
    key, k1, k2, kp = jax.random.split(key, 4)
    i1c = jax.random.normal(k1, (B3, D_in3), jnp.float32)
    i2c = jax.random.normal(k2, (B3, D_in3), jnp.float32)
    w3, b3 = _init_linear(kp, D_in3, D_out3)
    w_t3, b2d3, dout3 = prepare_fc_params(w3, b3)

    out3 = jax.block_until_ready(
        fc_multiply(i1c, i2c, w_t3, b2d3, dout3, tn=128,
                    max_resident_weight_bytes=0))
    ref3 = _reference(i1c, i2c, w3, b3)
    assert out3.shape == (B3, D_out3)
    assert jnp.allclose(out3, ref3, atol=1e-4, rtol=1e-4)

    # --- 4) optional bf16 MXU path (looser tolerance) -------------------------
    w_t2b, b2d2b, _ = prepare_fc_params(w2, b2, matmul_dtype=jnp.bfloat16)
    out4 = jax.block_until_ready(fc_multiply(i1b, i2b, w_t2b, b2d2b, dout2))
    assert out4.shape == (B2, D_out2)
    assert jnp.allclose(out4, ref2, atol=5e-2, rtol=5e-2)

    print("KERNEL_OK")
</pallas_src>

<mosaic_0001>
module attributes {stable_mosaic.version = 11 : i64} {
  func.func @fc_multiply_kernel(%arg0: i32, %arg1: memref<8x32xf32, #tpu.memory_space<vmem>>, %arg2: memref<8x32xf32, #tpu.memory_space<vmem>>, %arg3: memref<32x128xf32, #tpu.memory_space<vmem>>, %arg4: memref<1x128xf32, #tpu.memory_space<vmem>>, %arg5: memref<8x128xf32, #tpu.memory_space<vmem>>) attributes {dimension_semantics = [#tpu.dimension_semantics<parallel>], iteration_bounds = array<i64: 1>, scalar_prefetch = 0 : i64, scratch_operands = 0 : i64, tpu.core_type = #tpu.core_type<tc>, window_params = [{transform_indices = @transform_0, window_bounds = array<i64: 8, 32>}, {transform_indices = @transform_1, window_bounds = array<i64: 8, 32>}, {pipeline_mode = #tpu.pipeline_mode<synchronous>, transform_indices = @transform_2, window_bounds = array<i64: 32, 128>}, {pipeline_mode = #tpu.pipeline_mode<synchronous>, transform_indices = @transform_3, window_bounds = array<i64: 1, 128>}, {transform_indices = @transform_4, window_bounds = array<i64: 8, 128>}]} {
    %c0 = arith.constant 0 : index
    %c0_0 = arith.constant 0 : index
    %0 = vector.load %arg1[%c0, %c0_0] : memref<8x32xf32, #tpu.memory_space<vmem>>, vector<8x32xf32>
    %c0_1 = arith.constant 0 : index
    %c0_2 = arith.constant 0 : index
    %1 = vector.load %arg2[%c0_1, %c0_2] : memref<8x32xf32, #tpu.memory_space<vmem>>, vector<8x32xf32>
    %2 = arith.mulf %0, %1 : vector<8x32xf32>
    %c0_3 = arith.constant 0 : index
    %c0_4 = arith.constant 0 : index
    %3 = vector.load %arg3[%c0_3, %c0_4] : memref<32x128xf32, #tpu.memory_space<vmem>>, vector<32x128xf32>
    %cst = arith.constant dense<0.000000e+00> : vector<8x128xf32>
    %4 = tpu.matmul %2, %3, %cst {dimension_numbers = #tpu.dot_dimension_numbers<[1], [0], [0], [1], [0, 0, 1, 1], [], []>} : vector<8x32xf32>, vector<32x128xf32>, vector<8x128xf32> -> vector<8x128xf32>
    %c0_5 = arith.constant 0 : index
    %c0_6 = arith.constant 0 : index
    %5 = vector.load %arg4[%c0_5, %c0_6] : memref<1x128xf32, #tpu.memory_space<vmem>>, vector<1x128xf32>
    %6 = vector.broadcast %5 : vector<1x128xf32> to vector<8x128xf32>
    %7 = arith.addf %4, %6 : vector<8x128xf32>
    %cst_7 = arith.constant 0.000000e+00 : f32
    %8 = vector.broadcast %cst_7 : f32 to vector<8x128xf32>
    %9 = arith.maximumf %7, %8 : vector<8x128xf32>
    %c0_8 = arith.constant 0 : index
    %c0_9 = arith.constant 0 : index
    %10 = vector.load %arg5[%c0_8, %c0_9] : memref<8x128xf32, #tpu.memory_space<vmem>>, vector<8x128xf32>
    tpu.vector_store %arg5[%c0_8, %c0_9], %9 {strides = array<i32>} : memref<8x128xf32, #tpu.memory_space<vmem>>, vector<8x128xf32>,
    return
  }
  func.func @transform_0(%arg0: i32) -> (i32, i32) {
    %c0_i32 = arith.constant 0 : i32
    %c0_i32_0 = arith.constant 0 : i32
    return %arg0, %c0_i32 : i32, i32
  }
  func.func @transform_1(%arg0: i32) -> (i32, i32) {
    %c0_i32 = arith.constant 0 : i32
    %c0_i32_0 = arith.constant 0 : i32
    return %arg0, %c0_i32 : i32, i32
  }
  func.func @transform_2(%arg0: i32) -> (i32, i32) {
    %c0_i32 = arith.constant 0 : i32
    %c0_i32_0 = arith.constant 0 : i32
    %c0_i32_1 = arith.constant 0 : i32
    return %c0_i32, %c0_i32_0 : i32, i32
  }
  func.func @transform_3(%arg0: i32) -> (i32, i32) {
    %c0_i32 = arith.constant 0 : i32
    %c0_i32_0 = arith.constant 0 : i32
    %c0_i32_1 = arith.constant 0 : i32
    return %c0_i32, %c0_i32_0 : i32, i32
  }
  func.func @transform_4(%arg0: i32) -> (i32, i32) {
    %c0_i32 = arith.constant 0 : i32
    %c0_i32_0 = arith.constant 0 : i32
    return %arg0, %c0_i32 : i32, i32
  }
}

module attributes {stable_mosaic.version = 11 : i64} {
  func.func @fc_multiply_kernel(%arg0: i32, %arg1: memref<8x32xf32, #tpu.memory_space<vmem>>, %arg2: memref<8x32xf32, #tpu.memory_space<vmem>>, %arg3: memref<32x128xf32, #tpu.memory_space<vmem>>, %arg4: memref<1x128xf32, #tpu.memory_space<vmem>>, %arg5: memref<8x128xf32, #tpu.memory_space<vmem>>) attributes {dimension_semantics = [#tpu.dimension_semantics<parallel>], iteration_bounds = array<i64: 1>, scalar_prefetch = 0 : i64, scratch_operands = 0 : i64, tpu.core_type = #tpu.core_type<tc>, window_params = [{transform_indices = @transform_0, window_bounds = array<i64: 8, 32>}, {transform_indices = @transform_1, window_bounds = array<i64: 8, 32>}, {pipeline_mode = #tpu.pipeline_mode<synchronous>, transform_indices = @transform_2, window_bounds = array<i64: 32, 128>}, {pipeline_mode = #tpu.pipeline_mode<synchronous>, transform_indices = @transform_3, window_bounds = array<i64: 1, 128>}, {transform_indices = @transform_4, window_bounds = array<i64: 8, 128>}]} {
    %c0 = arith.constant 0 : index
    %c0_0 = arith.constant 0 : index
    %0 = vector.load %arg1[%c0, %c0_0] : memref<8x32xf32, #tpu.memory_space<vmem>>, vector<8x32xf32>
    %c0_1 = arith.constant 0 : index
    %c0_2 = arith.constant 0 : index
    %1 = vector.load %arg2[%c0_1, %c0_2] : memref<8x32xf32, #tpu.memory_space<vmem>>, vector<8x32xf32>
    %2 = arith.mulf %0, %1 : vector<8x32xf32>
    %c0_3 = arith.constant 0 : index
    %c0_4 = arith.constant 0 : index
    %3 = vector.load %arg3[%c0_3, %c0_4] : memref<32x128xf32, #tpu.memory_space<vmem>>, vector<32x128xf32>
    %cst = arith.constant dense<0.000000e+00> : vector<8x128xf32>
    %4 = tpu.matmul %2, %3, %cst {dimension_numbers = #tpu.dot_dimension_numbers<[1], [0], [0], [1], [0, 0, 1, 1], [], []>} : vector<8x32xf32>, vector<32x128xf32>, vector<8x128xf32> -> vector<8x128xf32>
    %c0_5 = arith.constant 0 : index
    %c0_6 = arith.constant 0 : index
    %5 = vector.load %arg4[%c0_5, %c0_6] : memref<1x128xf32, #tpu.memory_space<vmem>>, vector<1x128xf32>
    %6 = vector.broadcast %5 : vector<1x128xf32> to vector<8x128xf32>
    %7 = arith.addf %4, %6 : vector<8x128xf32>
    %cst_7 = arith.constant 0.000000e+00 : f32
    %8 = vector.broadcast %cst_7 : f32 to vector<8x128xf32>
    %9 = arith.maximumf %7, %8 : vector<8x128xf32>
    %c0_8 = arith.constant 0 : index
    %c0_9 = arith.constant 0 : index
    %10 = vector.load %arg5[%c0_8, %c0_9] : memref<8x128xf32, #tpu.memory_space<vmem>>, vector<8x128xf32>
    tpu.vector_store %arg5[%c0_8, %c0_9], %9 {strides = array<i32>} : memref<8x128xf32, #tpu.memory_space<vmem>>, vector<8x128xf32>,
    return
  }
  func.func @transform_0(%arg0: i32) -> (i32, i32) {
    %c0_i32 = arith.constant 0 : i32
    %c0_i32_0 = arith.constant 0 : i32
    return %arg0, %c0_i32 : i32, i32
  }
  func.func @transform_1(%arg0: i32) -> (i32, i32) {
    %c0_i32 = arith.constant 0 : i32
    %c0_i32_0 = arith.constant 0 : i32
    return %arg0, %c0_i32 : i32, i32
  }
  func.func @transform_2(%arg0: i32) -> (i32, i32) {
    %c0_i32 = arith.constant 0 : i32
    %c0_i32_0 = arith.constant 0 : i32
    %c0_i32_1 = arith.constant 0 : i32
    return %c0_i32, %c0_i32_0 : i32, i32
  }
  func.func @transform_3(%arg0: i32) -> (i32, i32) {
    %c0_i32 = arith.constant 0 : i32
    %c0_i32_0 = arith.constant 0 : i32
    %c0_i32_1 = arith.constant 0 : i32
    return %c0_i32, %c0_i32_0 : i32, i32
  }
  func.func @transform_4(%arg0: i32) -> (i32, i32) {
    %c0_i32 = arith.constant 0 : i32
    %c0_i32_0 = arith.constant 0 : i32
    return %arg0, %c0_i32 : i32, i32
  }
}

</mosaic_0001>

<llo_original>
// kernel: tpu_custom_call.1
$region0: #{tpu_custom_call.1}
  #allocation0 [shape = 'u32[]', space=smem, size = 0x4, offset = 0x4, fixed_abs, tag = 'smem constant byte address 0x4 - core index']
  #allocation1 [shape = 'u32[144,128]{1,0:T(1,128)}', space=vmem, size = 0x12000, scoped, tag = 'internal scratch']
  %s0 = inlined_call_operand.hbm [shape: f32[8,32], index: 0, kind: input, shape index: {}]
  %s1 = inlined_call_operand.hbm [shape: f32[8,32], index: 1, kind: input, shape index: {}]
  %s2 = inlined_call_operand.hbm [shape: f32[32,128], index: 2, kind: input, shape index: {}]
  %s3 = inlined_call_operand.vmem [shape: f32[1,128], index: 3, kind: input, shape index: {}]
  %s4 = inlined_call_operand.hbm [shape: f32[8,128], index: 4, kind: output, shape index: {}]
  %s5 = sld [smem:[#allocation0]]
  $region38: #{tpu_custom_call.1} parent=0
    _
  %s7 = ssub.s32 1, %s5
  %s8 = scalar_select 0, %s7, %s5
  $region1: #{tpu_custom_call.1} parent=0
    #allocation2 [shape = 'u8[4096]{0}', space=vmem, size = 0x1000, scoped, tag = 'input window, operand 0, single buffered']
    #allocation3 [shape = 's32[1]{0}', space=sflag, size = 0x4, scoped, tag = 'scoped memory for tpu_custom_call.1']
    #allocation4 [shape = 's32[1]{0}', space=sflag, size = 0x4, scoped, tag = 'scoped memory for tpu_custom_call.1']
    #allocation5 [shape = 'u8[4096]{0}', space=vmem, size = 0x1000, scoped, tag = 'input window, operand 1, single buffered']
    #allocation6 [shape = 's32[1]{0}', space=sflag, size = 0x4, scoped, tag = 'scoped memory for tpu_custom_call.1']
    #allocation7 [shape = 'u8[16384]{0}', space=vmem, size = 0x4000, scoped, tag = 'input window, operand 2, single buffered']
    #allocation8 [shape = 'u8[4096]{0}', space=vmem, size = 0x1000, scoped, tag = 'output window, operand 0, single buffered']
    %9 = vsyncpa [#allocation3], 0
    %10 = vsyncpa [#allocation6], 0
    %11 = vsyncpa [#allocation4], 0
    // Predicated region
    $region2: #{tpu_custom_call.1} parent=1 // pred_check
      _
    $region3: #{tpu_custom_call.1} parent=1 // pred_check_branch
      %13 = sbr.rel (0) target = $region5
    $region4: #{tpu_custom_call.1} parent=1 // pred_region
      %s15 = ssub.s32 128, 128
      %16 = vsyncadd [#allocation3], %s15
      %s18 = sshll.u32 [#allocation2], 4
      %s19 = int_to_ptr.vmem [resolvable:$true] %s18
      %21 = dma.hbm_to_vmem [thread:$0]  %s0, 128, %s19, [#allocation3]
    $region5: #{tpu_custom_call.1} parent=1 // pred_fallthru
      _
    // Predicated region
    $region6: #{tpu_custom_call.1} parent=1 // pred_check
      _
    $region7: #{tpu_custom_call.1} parent=1 // pred_check_branch
      %23 = sbr.rel (0) target = $region9
    $region8: #{tpu_custom_call.1} parent=1 // pred_region
      %s25 = ssub.s32 128, 128
      %26 = vsyncadd [#allocation6], %s25
      %s28 = sshll.u32 [#allocation5], 4
      %s29 = int_to_ptr.vmem [resolvable:$true] %s28
      %31 = dma.hbm_to_vmem [thread:$0]  %s1, 128, %s29, [#allocation6]
    $region9: #{tpu_custom_call.1} parent=1 // pred_fallthru
      _
    // Predicated region
    $region10: #{tpu_custom_call.1} parent=1 // pred_check
      _
    $region11: #{tpu_custom_call.1} parent=1 // pred_check_branch
      %33 = sbr.rel (0) target = $region13
    $region12: #{tpu_custom_call.1} parent=1 // pred_region
      %s35 = ssub.s32 512, 512
      %36 = vsyncadd [#allocation6], %s35
      %s37 = sshll.u32 [#allocation7], 4
      %s38 = int_to_ptr.vmem [resolvable:$true] %s37
      %43 = dma.hbm_to_vmem [thread:$0]  %s2, 512, %s38, [#allocation6], 128, 128, 8
    $region13: #{tpu_custom_call.1} parent=1 // pred_fallthru
      _
    // Predicated region
    $region14: #{tpu_custom_call.1} parent=1 // pred_check
      _
    $region15: #{tpu_custom_call.1} parent=1 // pred_check_branch
      %45 = sbr.rel (0) target = $region17
    $region16: #{tpu_custom_call.1} parent=1 // pred_region
      _
    $region17: #{tpu_custom_call.1} parent=1 // pred_fallthru
      _
    // Predicated region
    $region18: #{tpu_custom_call.1} parent=1 // pred_check
      _
    $region19: #{tpu_custom_call.1} parent=1 // pred_check_branch
      %47 = sbr.rel (0) target = $region21
    $region20: #{tpu_custom_call.1} parent=1 // pred_region
      %48 = dma.done [#allocation3], 128
    $region21: #{tpu_custom_call.1} parent=1 // pred_fallthru
      _
    // Predicated region
    $region22: #{tpu_custom_call.1} parent=1 // pred_check
      _
    $region23: #{tpu_custom_call.1} parent=1 // pred_check_branch
      %50 = sbr.rel (0) target = $region25
    $region24: #{tpu_custom_call.1} parent=1 // pred_region
      %51 = dma.done [#allocation6], 128
    $region25: #{tpu_custom_call.1} parent=1 // pred_fallthru
      _
    // Predicated region
    $region26: #{tpu_custom_call.1} parent=1 // pred_check
      _
    $region27: #{tpu_custom_call.1} parent=1 // pred_check_branch
      %53 = sbr.rel (0) target = $region29
    $region28: #{tpu_custom_call.1} parent=1 // pred_region
      %54 = dma.done [#allocation6], 512
    $region29: #{tpu_custom_call.1} parent=1 // pred_fallthru
      _
    %v55 = vld [vmem:[#allocation2] sm:$0xff]
    %v56 = vld [vmem:[#allocation5] sm:$0xff]
    %v57 = vmul.f32 %v55, %v56
    %v58 = vld [vmem:[#allocation7] sm:$0xff]
    %v59 = vld [vmem:[#allocation7 + $0x8] sm:$0xff]
    %v60 = vld [vmem:[#allocation7 + $0x10] sm:$0xff]
    %v61 = vld [vmem:[#allocation7 + $0x18] sm:$0xff]
    %v62 = vld [vmem:[%s3] sm:$0x1]
    %v64 = vlaneseq
    %v65 = vshrl.u32 %v64, 7
    %v66 = vsub.s32 0, %v65
    %v67 = vrot.slane %v62, %v66
    %vm69 = vcmask 261120
    %v71 = vsel %vm69, %v57, 0
    %73 = vmatprep.subr.mxu0 0.0
    %74 = vmatpush1.msra.mxu0 %v58
    %75 = vmatprep.subr.mxu0 0.0
    %76 = vmatpush1.msra.mxu0 %v59
    %77 = vmatprep.subr.mxu0 0.0
    %78 = vmatpush1.msra.mxu0 %v60
    %79 = vmatprep.subr.mxu0 0.0
    %80 = vmatpush1.msra.mxu0 %v61
    %81 = vmatprep.subr.mxu0 0.0
    %82 = vmatpush1.msra.mxu0 0.0
    %83 = vmatprep.subr.mxu0 0.0
    %84 = vmatpush1.msra.mxu0 0.0
    %85 = vmatprep.subr.mxu0 0.0
    %86 = vmatpush1.msra.mxu0 0.0
    %87 = vmatprep.subr.mxu0 0.0
    %88 = vmatpush1.msra.mxu0 0.0
    %89 = vmatprep.subr.mxu0 0.0
    %90 = vmatpush1.msra.mxu0 0.0
    %91 = vmatprep.subr.mxu0 0.0
    %92 = vmatpush1.msra.mxu0 0.0
    %93 = vmatprep.subr.mxu0 0.0
    %94 = vmatpush1.msra.mxu0 0.0
    %95 = vmatprep.subr.mxu0 0.0
    %96 = vmatpush1.msra.mxu0 0.0
    %97 = vmatprep.subr.mxu0 0.0
    %98 = vmatpush1.msra.mxu0 0.0
    %99 = vmatprep.subr.mxu0 0.0
    %100 = vmatpush1.msra.mxu0 0.0
    %101 = vmatprep.subr.mxu0 0.0
    %102 = vmatpush1.msra.mxu0 0.0
    %103 = vmatprep.subr.mxu0 0.0
    %104 = vmatpush1.msra.mxu0 0.0
    %105 = vmatprep.subr.mxu0 0.0
    %106 = vmatpush1.msra.mxu0 0.0
    %107 = vmatprep.subr.mxu0 0.0
    %108 = vmatpush1.msra.mxu0 0.0
    %109 = vmatprep.subr.mxu0 0.0
    %110 = vmatpush1.msra.mxu0 0.0
    %111 = vmatprep.subr.mxu0 0.0
    %112 = vmatpush1.msra.mxu0 0.0
    %113 = vmatprep.subr.mxu0 0.0
    %114 = vmatpush1.msra.mxu0 0.0
    %115 = vmatprep.subr.mxu0 0.0
    %116 = vmatpush1.msra.mxu0 0.0
    %117 = vmatprep.subr.mxu0 0.0
    %118 = vmatpush1.msra.mxu0 0.0
    %119 = vmatprep.subr.mxu0 0.0
    %120 = vmatpush1.msra.mxu0 0.0
    %121 = vmatprep.subr.mxu0 0.0
    %122 = vmatpush1.msra.mxu0 0.0
    %123 = vmatprep.subr.mxu0 0.0
    %124 = vmatpush1.msra.mxu0 0.0
    %125 = vmatprep.subr.mxu0 0.0
    %126 = vmatpush1.msra.mxu0 0.0
    %127 = vmatprep.subr.mxu0 0.0
    %128 = vmatpush1.msra.mxu0 0.0
    %129 = vmatprep.subr.mxu0 0.0
    %130 = vmatpush1.msra.mxu0 0.0
    %131 = vmatprep.subr.mxu0 0.0
    %132 = vmatpush1.msra.mxu0 0.0
    %133 = vmatprep.subr.mxu0 0.0
    %134 = vmatpush1.msra.mxu0 0.0
    %135 = vmatprep.subr.mxu0 0.0
    %136 = vmatpush1.msra.mxu0 0.0
    %137 = vmatprep.mubr.f32.mxu0 0.0
    %138 = vmatmul.mubr.f32.gmra.mrb[0].mxu0 %v71
    %v139 = vpop.f32.mrb[0].mxu0
    %v140 = vadd.f32 %v67, %v139
    %v141 = vpop.f32.mrb[0].mxu0
    %142 = vdwg.mxu0
    %v143 = vmax.f32 %v140, 0.0
    %144 = vst [vmem:[#allocation8] sm:$0xff] %v143
    // Predicated region
    $region30: #{tpu_custom_call.1} parent=1 // pred_check
      _
    $region31: #{tpu_custom_call.1} parent=1 // pred_check_branch
      %146 = sbr.rel (0) target = $region33
    $region32: #{tpu_custom_call.1} parent=1 // pred_region
      %s148 = ssub.s32 128, 128
      %149 = vsyncadd [#allocation4], %s148
      %s151 = sshll.u32 [#allocation8], 4
      %s152 = int_to_ptr.vmem [resolvable:$true] %s151
      %154 = dma.vmem_to_hbm [thread:$0]  %s152, 128, %s4, [#allocation4]
    $region33: #{tpu_custom_call.1} parent=1 // pred_fallthru
      _
    // Predicated region
    $region34: #{tpu_custom_call.1} parent=1 // pred_check
      _
    $region35: #{tpu_custom_call.1} parent=1 // pred_check_branch
      %156 = sbr.rel (0) target = $region37
    $region36: #{tpu_custom_call.1} parent=1 // pred_region
      %157 = dma.done [#allocation4], 128
    $region37: #{tpu_custom_call.1} parent=1 // pred_fallthru
      _
    %158 = vsyncpa [#allocation3], 1
    %159 = vsyncpa [#allocation6], 1
    %160 = vsyncpa [#allocation4], 1

// kernel: tpu_custom_call.1
$region0: #{tpu_custom_call.1}
  #allocation0 [shape = 'u32[]', space=smem, size = 0x4, offset = 0x4, fixed_abs, tag = 'smem constant byte address 0x4 - core index']
  #allocation1 [shape = 'u32[144,128]{1,0:T(1,128)}', space=vmem, size = 0x12000, scoped, tag = 'internal scratch']
  %s0 = inlined_call_operand.hbm [shape: f32[8,32], index: 0, kind: input, shape index: {}]
  %s1 = inlined_call_operand.hbm [shape: f32[8,32], index: 1, kind: input, shape index: {}]
  %s2 = inlined_call_operand.hbm [shape: f32[32,128], index: 2, kind: input, shape index: {}]
  %s3 = inlined_call_operand.vmem [shape: f32[1,128], index: 3, kind: input, shape index: {}]
  %s4 = inlined_call_operand.hbm [shape: f32[8,128], index: 4, kind: output, shape index: {}]
  %s5 = sld [smem:[#allocation0]]
  $region38: #{tpu_custom_call.1} parent=0
    _
  %s7 = ssub.s32 1, %s5
  %s8 = scalar_select 0, %s7, %s5
  $region1: #{tpu_custom_call.1} parent=0
    #allocation2 [shape = 'u8[4096]{0}', space=vmem, size = 0x1000, scoped, tag = 'input window, operand 0, single buffered']
    #allocation3 [shape = 's32[1]{0}', space=sflag, size = 0x4, scoped, tag = 'scoped memory for tpu_custom_call.1']
    #allocation4 [shape = 's32[1]{0}', space=sflag, size = 0x4, scoped, tag = 'scoped memory for tpu_custom_call.1']
    #allocation5 [shape = 'u8[4096]{0}', space=vmem, size = 0x1000, scoped, tag = 'input window, operand 1, single buffered']
    #allocation6 [shape = 's32[1]{0}', space=sflag, size = 0x4, scoped, tag = 'scoped memory for tpu_custom_call.1']
    #allocation7 [shape = 'u8[16384]{0}', space=vmem, size = 0x4000, scoped, tag = 'input window, operand 2, single buffered']
    #allocation8 [shape = 'u8[4096]{0}', space=vmem, size = 0x1000, scoped, tag = 'output window, operand 0, single buffered']
    %9 = vsyncpa [#allocation3], 0
    %10 = vsyncpa [#allocation6], 0
    %11 = vsyncpa [#allocation4], 0
    // Predicated region
    $region2: #{tpu_custom_call.1} parent=1 // pred_check
      _
    $region3: #{tpu_custom_call.1} parent=1 // pred_check_branch
      %13 = sbr.rel (0) target = $region5
    $region4: #{tpu_custom_call.1} parent=1 // pred_region
      %s15 = ssub.s32 128, 128
      %16 = vsyncadd [#allocation3], %s15
      %s18 = sshll.u32 [#allocation2], 4
      %s19 = int_to_ptr.vmem [resolvable:$true] %s18
      %21 = dma.hbm_to_vmem [thread:$0]  %s0, 128, %s19, [#allocation3]
    $region5: #{tpu_custom_call.1} parent=1 // pred_fallthru
      _
    // Predicated region
    $region6: #{tpu_custom_call.1} parent=1 // pred_check
      _
    $region7: #{tpu_custom_call.1} parent=1 // pred_check_branch
      %23 = sbr.rel (0) target = $region9
    $region8: #{tpu_custom_call.1} parent=1 // pred_region
      %s25 = ssub.s32 128, 128
      %26 = vsyncadd [#allocation6], %s25
      %s28 = sshll.u32 [#allocation5], 4
      %s29 = int_to_ptr.vmem [resolvable:$true] %s28
      %31 = dma.hbm_to_vmem [thread:$0]  %s1, 128, %s29, [#allocation6]
    $region9: #{tpu_custom_call.1} parent=1 // pred_fallthru
      _
    // Predicated region
    $region10: #{tpu_custom_call.1} parent=1 // pred_check
      _
    $region11: #{tpu_custom_call.1} parent=1 // pred_check_branch
      %33 = sbr.rel (0) target = $region13
    $region12: #{tpu_custom_call.1} parent=1 // pred_region
      %s35 = ssub.s32 512, 512
      %36 = vsyncadd [#allocation6], %s35
      %s37 = sshll.u32 [#allocation7], 4
      %s38 = int_to_ptr.vmem [resolvable:$true] %s37
      %43 = dma.hbm_to_vmem [thread:$0]  %s2, 512, %s38, [#allocation6], 128, 128, 8
    $region13: #{tpu_custom_call.1} parent=1 // pred_fallthru
      _
    // Predicated region
    $region14: #{tpu_custom_call.1} parent=1 // pred_check
      _
    $region15: #{tpu_custom_call.1} parent=1 // pred_check_branch
      %45 = sbr.rel (0) target = $region17
    $region16: #{tpu_custom_call.1} parent=1 // pred_region
      _
    $region17: #{tpu_custom_call.1} parent=1 // pred_fallthru
      _
    // Predicated region
    $region18: #{tpu_custom_call.1} parent=1 // pred_check
      _
    $region19: #{tpu_custom_call.1} parent=1 // pred_check_branch
      %47 = sbr.rel (0) target = $region21
    $region20: #{tpu_custom_call.1} parent=1 // pred_region
      %48 = dma.done [#allocation3], 128
    $region21: #{tpu_custom_call.1} parent=1 // pred_fallthru
      _
    // Predicated region
    $region22: #{tpu_custom_call.1} parent=1 // pred_check
      _
    $region23: #{tpu_custom_call.1} parent=1 // pred_check_branch
      %50 = sbr.rel (0) target = $region25
    $region24: #{tpu_custom_call.1} parent=1 // pred_region
      %51 = dma.done [#allocation6], 128
    $region25: #{tpu_custom_call.1} parent=1 // pred_fallthru
      _
    // Predicated region
    $region26: #{tpu_custom_call.1} parent=1 // pred_check
      _
    $region27: #{tpu_custom_call.1} parent=1 // pred_check_branch
      %53 = sbr.rel (0) target = $region29
    $region28: #{tpu_custom_call.1} parent=1 // pred_region
      %54 = dma.done [#allocation6], 512
    $region29: #{tpu_custom_call.1} parent=1 // pred_fallthru
      _
    %v55 = vld [vmem:[#allocation2] sm:$0xff]
    %v56 = vld [vmem:[#allocation5] sm:$0xff]
    %v57 = vmul.f32 %v55, %v56
    %v58 = vld [vmem:[#allocation7] sm:$0xff]
    %v59 = vld [vmem:[#allocation7 + $0x8] sm:$0xff]
    %v60 = vld [vmem:[#allocation7 + $0x10] sm:$0xff]
    %v61 = vld [vmem:[#allocation7 + $0x18] sm:$0xff]
    %v62 = vld [vmem:[%s3] sm:$0x1]
    %v64 = vlaneseq
    %v65 = vshrl.u32 %v64, 7
    %v66 = vsub.s32 0, %v65
    %v67 = vrot.slane %v62, %v66
    %vm69 = vcmask 261120
    %v71 = vsel %vm69, %v57, 0
    %73 = vmatprep.subr.mxu0 0.0
    %74 = vmatpush1.msra.mxu0 %v58
    %75 = vmatprep.subr.mxu0 0.0
    %76 = vmatpush1.msra.mxu0 %v59
    %77 = vmatprep.subr.mxu0 0.0
    %78 = vmatpush1.msra.mxu0 %v60
    %79 = vmatprep.subr.mxu0 0.0
    %80 = vmatpush1.msra.mxu0 %v61
    %81 = vmatprep.subr.mxu0 0.0
    %82 = vmatpush1.msra.mxu0 0.0
    %83 = vmatprep.subr.mxu0 0.0
    %84 = vmatpush1.msra.mxu0 0.0
    %85 = vmatprep.subr.mxu0 0.0
    %86 = vmatpush1.msra.mxu0 0.0
    %87 = vmatprep.subr.mxu0 0.0
    %88 = vmatpush1.msra.mxu0 0.0
    %89 = vmatprep.subr.mxu0 0.0
    %90 = vmatpush1.msra.mxu0 0.0
    %91 = vmatprep.subr.mxu0 0.0
    %92 = vmatpush1.msra.mxu0 0.0
    %93 = vmatprep.subr.mxu0 0.0
    %94 = vmatpush1.msra.mxu0 0.0
    %95 = vmatprep.subr.mxu0 0.0
    %96 = vmatpush1.msra.mxu0 0.0
    %97 = vmatprep.subr.mxu0 0.0
    %98 = vmatpush1.msra.mxu0 0.0
    %99 = vmatprep.subr.mxu0 0.0
    %100 = vmatpush1.msra.mxu0 0.0
    %101 = vmatprep.subr.mxu0 0.0
    %102 = vmatpush1.msra.mxu0 0.0
    %103 = vmatprep.subr.mxu0 0.0
    %104 = vmatpush1.msra.mxu0 0.0
    %105 = vmatprep.subr.mxu0 0.0
    %106 = vmatpush1.msra.mxu0 0.0
    %107 = vmatprep.subr.mxu0 0.0
    %108 = vmatpush1.msra.mxu0 0.0
    %109 = vmatprep.subr.mxu0 0.0
    %110 = vmatpush1.msra.mxu0 0.0
    %111 = vmatprep.subr.mxu0 0.0
    %112 = vmatpush1.msra.mxu0 0.0
    %113 = vmatprep.subr.mxu0 0.0
    %114 = vmatpush1.msra.mxu0 0.0
    %115 = vmatprep.subr.mxu0 0.0
    %116 = vmatpush1.msra.mxu0 0.0
    %117 = vmatprep.subr.mxu0 0.0
    %118 = vmatpush1.msra.mxu0 0.0
    %119 = vmatprep.subr.mxu0 0.0
    %120 = vmatpush1.msra.mxu0 0.0
    %121 = vmatprep.subr.mxu0 0.0
    %122 = vmatpush1.msra.mxu0 0.0
    %123 = vmatprep.subr.mxu0 0.0
    %124 = vmatpush1.msra.mxu0 0.0
    %125 = vmatprep.subr.mxu0 0.0
    %126 = vmatpush1.msra.mxu0 0.0
    %127 = vmatprep.subr.mxu0 0.0
    %128 = vmatpush1.msra.mxu0 0.0
    %129 = vmatprep.subr.mxu0 0.0
    %130 = vmatpush1.msra.mxu0 0.0
    %131 = vmatprep.subr.mxu0 0.0
    %132 = vmatpush1.msra.mxu0 0.0
    %133 = vmatprep.subr.mxu0 0.0
    %134 = vmatpush1.msra.mxu0 0.0
    %135 = vmatprep.subr.mxu0 0.0
    %136 = vmatpush1.msra.mxu0 0.0
    %137 = vmatprep.mubr.f32.mxu0 0.0
    %138 = vmatmul.mubr.f32.gmra.mrb[0].mxu0 %v71
    %v139 = vpop.f32.mrb[0].mxu0
    %v140 = vadd.f32 %v67, %v139
    %v141 = vpop.f32.mrb[0].mxu0
    %142 = vdwg.mxu0
    %v143 = vmax.f32 %v140, 0.0
    %144 = vst [vmem:[#allocation8] sm:$0xff] %v143
    // Predicated region
    $region30: #{tpu_custom_call.1} parent=1 // pred_check
      _
    $region31: #{tpu_custom_call.1} parent=1 // pred_check_branch
      %146 = sbr.rel (0) target = $region33
    $region32: #{tpu_custom_call.1} parent=1 // pred_region
      %s148 = ssub.s32 128, 128
      %149 = vsyncadd [#allocation4], %s148
      %s151 = sshll.u32 [#allocation8], 4
      %s152 = int_to_ptr.vmem [resolvable:$true] %s151
      %154 = dma.vmem_to_hbm [thread:$0]  %s152, 128, %s4, [#allocation4]
    $region33: #{tpu_custom_call.1} parent=1 // pred_fallthru
      _
    // Predicated region
    $region34: #{tpu_custom_call.1} parent=1 // pred_check
      _
    $region35: #{tpu_custom_call.1} parent=1 // pred_check_branch
      %156 = sbr.rel (0) target = $region37
    $region36: #{tpu_custom_call.1} parent=1 // pred_region
      %157 = dma.done [#allocation4], 128
    $region37: #{tpu_custom_call.1} parent=1 // pred_fallthru
      _
    %158 = vsyncpa [#allocation3], 1
    %159 = vsyncpa [#allocation6], 1
    %160 = vsyncpa [#allocation4], 1

</llo_original>
